<compile_context>
chip_gen: v7x
topology: tpu7x:2x2x1
jax: 0.10.0
libtpu: 0.0.40
codegen_flags: <defaults>
</compile_context>

<pallas_src>
import functools

import jax
import jax.numpy as jnp
from jax.experimental import pallas as pl
from jax.experimental.pallas import tpu as pltpu

HIDDEN = 128
N_OUT = 2
N_OUT_PAD = 8                 # lane-friendlier than 2; extra cols zero + sliced off

_TARGET_TILE_BYTES = 2 << 20  # ~2 MiB of x per block (double-buffered -> ~4 MiB)
_VMEM_BUDGET = 40 << 20       # budget for sizing tb (safe on v5e/v6e/v7x per-TC)
_VMEM_LIMIT_MAX = 48 << 20    # never ask Mosaic for more than this scoped VMEM


def _round_up(n, m):
    return ((n + m - 1) // m) * m


def _pick_batch_tile(B, E):
    """Pick a batch tile (multiple of 8) sized by bytes, capped by VMEM."""
    row_bytes = E * 4                                   # f32 row of x
    b8 = _round_up(max(B, 1), 8)

    # Target ~2 MiB per x block.
    tb = max(8, (_TARGET_TILE_BYTES // row_bytes) // 8 * 8)

    # VMEM cap: 2x x-block + 2x out-block + 2x weights (default buffering) + margin.
    w_bytes = (E * HIDDEN + HIDDEN + HIDDEN * N_OUT_PAD + N_OUT_PAD) * 4
    per_row = 2 * row_bytes + 2 * N_OUT_PAD * 4
    avail = _VMEM_BUDGET - 2 * w_bytes - (2 << 20)
    if avail >= per_row * 8:
        tb = min(tb, (avail // per_row) // 8 * 8)
    else:
        tb = 8

    tb = min(tb, b8)

    # When there is real work (>1 MiB of x), keep >=2 grid steps so v7x
    # megacore can give each TensorCore at least one block.
    if b8 * row_bytes > (1 << 20):
        tb = min(tb, _round_up(pl.cdiv(b8, 2), 8))

    return max(tb, 8)


def _detector_kernel(x_ref, w1_ref, b1_ref, w2_ref, b2_ref, o_ref):
    # fc1: [TB, E] @ [E, 128] -> f32 accumulate on the MXU (not the bottleneck).
    h = jnp.dot(x_ref[...], w1_ref[...], preferred_element_type=jnp.float32)
    # bias + ReLU on the VPU.
    h = jnp.maximum(h + b1_ref[...], 0.0)
    # fc2: [TB, 128] @ [128, 8] -> f32 accumulate.
    out = jnp.dot(h, w2_ref[...], preferred_element_type=jnp.float32)
    o_ref[...] = (out + b2_ref[...]).astype(o_ref.dtype)


@jax.jit
def detector_forward(x, w1, b1, w2, b2):
    """x: [B, E] f32; w1: [E, 128]; b1: [1, 128]; w2: [128, 2]; b2: [1, 2]."""
    B, E = x.shape

    x_f = x.astype(jnp.float32)
    w1_f = w1.astype(jnp.float32)
    b1_f = b1.reshape(1, HIDDEN).astype(jnp.float32)

    # Pad fc2 to 8 output columns (zeros) so the store is not a 2-lane masked
    # slab; padding columns are sliced off below. Weights are tiny (one-time).
    w2_p = jnp.zeros((HIDDEN, N_OUT_PAD), jnp.float32).at[:, :N_OUT].set(
        w2.astype(jnp.float32))
    b2_p = jnp.zeros((1, N_OUT_PAD), jnp.float32).at[:, :N_OUT].set(
        b2.reshape(1, N_OUT).astype(jnp.float32))

    tb = _pick_batch_tile(B, E)
    grid = (pl.cdiv(B, tb),)   # ragged last block is masked by Pallas (no pad copy)

    # Explicit scoped-VMEM limit: covers x/out double buffers + weights (at
    # their default double buffering) with headroom; >= v5e's 16 MiB default.
    w_bytes = (E * HIDDEN + HIDDEN + HIDDEN * N_OUT_PAD + N_OUT_PAD) * 4
    vmem_bytes = 2 * tb * E * 4 + 2 * tb * N_OUT_PAD * 4 + 2 * w_bytes
    vmem_limit = int(min(_VMEM_LIMIT_MAX, max(vmem_bytes + (2 << 20), 16 << 20)))

    flops = 2 * B * (E * HIDDEN + HIDDEN * N_OUT_PAD)
    bytes_accessed = (B * E * 4          # x (f32, read once)
                      + w_bytes          # weights + biases
                      + B * N_OUT_PAD * 4)  # output (f32)

    out_padded = pl.pallas_call(
        _detector_kernel,
        out_shape=jax.ShapeDtypeStruct((B, N_OUT_PAD), jnp.float32),
        grid_spec=pltpu.PrefetchScalarGridSpec(
            num_scalar_prefetch=0,
            grid=grid,
            in_specs=[
                pl.BlockSpec((tb, E), lambda i: (i, 0)),              # x: batch-tiled
                pl.BlockSpec((E, HIDDEN), lambda i: (0, 0)),          # w1: resident
                pl.BlockSpec((1, HIDDEN), lambda i: (0, 0)),          # b1: resident
                pl.BlockSpec((HIDDEN, N_OUT_PAD), lambda i: (0, 0)),  # w2: resident
                pl.BlockSpec((1, N_OUT_PAD), lambda i: (0, 0)),       # b2: resident
            ],
            out_specs=pl.BlockSpec((tb, N_OUT_PAD), lambda i: (i, 0)),
        ),
        compiler_params=pltpu.CompilerParams(
            dimension_semantics=("parallel",),   # megacore-shardable on v7x
            vmem_limit_bytes=vmem_limit),
        cost_estimate=pl.CostEstimate(
            flops=flops, transcendentals=0, bytes_accessed=bytes_accessed),
    )(x_f, w1_f, b1_f, w2_p, b2_p)

    return out_padded[:, :N_OUT]


def init_detector_params(key, encode_size, hidden=HIDDEN, n_out=N_OUT):
    """Deterministic init mimicking nn.Linear default (U(-1/sqrt(fan_in), ...))."""
    k1, k2, k3, k4 = jax.random.split(key, 4)
    bound1 = 1.0 / jnp.sqrt(jnp.float32(encode_size))
    bound2 = 1.0 / jnp.sqrt(jnp.float32(hidden))
    # Stored as [in, out] (transposed vs. PyTorch's [out, in]).
    w1 = jax.random.uniform(k1, (encode_size, hidden), jnp.float32, -bound1, bound1)
    b1 = jax.random.uniform(k2, (1, hidden), jnp.float32, -bound1, bound1)
    w2 = jax.random.uniform(k3, (hidden, n_out), jnp.float32, -bound2, bound2)
    b2 = jax.random.uniform(k4, (1, n_out), jnp.float32, -bound2, bound2)
    return w1, b1, w2, b2


def _reference(x, w1, b1, w2, b2):
    return jnp.maximum(x @ w1 + b1, 0.0) @ w2 + b2


if __name__ == "__main__":
    key = jax.random.PRNGKey(0)
    kx1, kx2, kp = jax.random.split(key, 3)

    encode_size = 32
    w1, b1, w2, b2 = init_detector_params(kp, encode_size)

    # 1) Small batch (single full-extent tile path).
    x_small = jax.random.normal(kx1, (8, encode_size), jnp.float32)
    out_small = jax.block_until_ready(detector_forward(x_small, w1, b1, w2, b2))
    ref_small = _reference(x_small, w1, b1, w2, b2)
    assert out_small.shape == (8, N_OUT)
    assert jnp.allclose(out_small, ref_small, atol=2e-2, rtol=2e-2), \
        "mismatch vs reference (small batch)"

    # 2) Larger, non-multiple-of-tile batch (ragged last block via cdiv grid).
    x_big = jax.random.normal(kx2, (1037, encode_size), jnp.float32)
    out_big = jax.block_until_ready(detector_forward(x_big, w1, b1, w2, b2))
    ref_big = _reference(x_big, w1, b1, w2, b2)
    assert out_big.shape == (1037, N_OUT)
    assert jnp.allclose(out_big, ref_big, atol=2e-2, rtol=2e-2), \
        "mismatch vs reference (ragged grid)"

    print("KERNEL_OK")
</pallas_src>

<mosaic_0001>
module attributes {stable_mosaic.version = 11 : i64} {
  func.func @_detector_kernel(%arg0: i32, %arg1: memref<8x32xf32, #tpu.memory_space<vmem>>, %arg2: memref<32x128xf32, #tpu.memory_space<vmem>>, %arg3: memref<1x128xf32, #tpu.memory_space<vmem>>, %arg4: memref<128x8xf32, #tpu.memory_space<vmem>>, %arg5: memref<1x8xf32, #tpu.memory_space<vmem>>, %arg6: memref<8x8xf32, #tpu.memory_space<vmem>>) attributes {dimension_semantics = [#tpu.dimension_semantics<parallel>], iteration_bounds = array<i64: 1>, scalar_prefetch = 0 : i64, scratch_operands = 0 : i64, tpu.core_type = #tpu.core_type<tc>, window_params = [{transform_indices = @transform_0, window_bounds = array<i64: 8, 32>}, {pipeline_mode = #tpu.pipeline_mode<synchronous>, transform_indices = @transform_1, window_bounds = array<i64: 32, 128>}, {pipeline_mode = #tpu.pipeline_mode<synchronous>, transform_indices = @transform_2, window_bounds = array<i64: 1, 128>}, {pipeline_mode = #tpu.pipeline_mode<synchronous>, transform_indices = @transform_3, window_bounds = array<i64: 128, 8>}, {pipeline_mode = #tpu.pipeline_mode<synchronous>, transform_indices = @transform_4, window_bounds = array<i64: 1, 8>}, {transform_indices = @transform_5, window_bounds = array<i64: 8, 8>}]} {
    %c0 = arith.constant 0 : index
    %c0_0 = arith.constant 0 : index
    %0 = vector.load %arg1[%c0, %c0_0] : memref<8x32xf32, #tpu.memory_space<vmem>>, vector<8x32xf32>
    %c0_1 = arith.constant 0 : index
    %c0_2 = arith.constant 0 : index
    %1 = vector.load %arg2[%c0_1, %c0_2] : memref<32x128xf32, #tpu.memory_space<vmem>>, vector<32x128xf32>
    %cst = arith.constant dense<0.000000e+00> : vector<8x128xf32>
    %2 = tpu.matmul %0, %1, %cst {dimension_numbers = #tpu.dot_dimension_numbers<[1], [0], [0], [1], [0, 0, 1, 1], [], []>} : vector<8x32xf32>, vector<32x128xf32>, vector<8x128xf32> -> vector<8x128xf32>
    %c0_3 = arith.constant 0 : index
    %c0_4 = arith.constant 0 : index
    %3 = vector.load %arg3[%c0_3, %c0_4] : memref<1x128xf32, #tpu.memory_space<vmem>>, vector<1x128xf32>
    %4 = vector.broadcast %3 : vector<1x128xf32> to vector<8x128xf32>
    %5 = arith.addf %2, %4 : vector<8x128xf32>
    %cst_5 = arith.constant 0.000000e+00 : f32
    %6 = vector.broadcast %cst_5 : f32 to vector<8x128xf32>
    %7 = arith.maximumf %5, %6 : vector<8x128xf32>
    %c0_6 = arith.constant 0 : index
    %c0_7 = arith.constant 0 : index
    %8 = vector.load %arg4[%c0_6, %c0_7] : memref<128x8xf32, #tpu.memory_space<vmem>>, vector<128x8xf32>
    %cst_8 = arith.constant dense<0.000000e+00> : vector<8x8xf32>
    %9 = tpu.matmul %7, %8, %cst_8 {dimension_numbers = #tpu.dot_dimension_numbers<[1], [0], [0], [1], [0, 0, 1, 1], [], []>} : vector<8x128xf32>, vector<128x8xf32>, vector<8x8xf32> -> vector<8x8xf32>
    %c0_9 = arith.constant 0 : index
    %c0_10 = arith.constant 0 : index
    %10 = vector.load %arg5[%c0_9, %c0_10] : memref<1x8xf32, #tpu.memory_space<vmem>>, vector<1x8xf32>
    %11 = vector.broadcast %10 : vector<1x8xf32> to vector<8x8xf32>
    %12 = arith.addf %9, %11 : vector<8x8xf32>
    %c0_11 = arith.constant 0 : index
    %c0_12 = arith.constant 0 : index
    %13 = vector.load %arg6[%c0_11, %c0_12] : memref<8x8xf32, #tpu.memory_space<vmem>>, vector<8x8xf32>
    tpu.vector_store %arg6[%c0_11, %c0_12], %12 {strides = array<i32>} : memref<8x8xf32, #tpu.memory_space<vmem>>, vector<8x8xf32>,
    return
  }
  func.func @transform_0(%arg0: i32) -> (i32, i32) {
    %c0_i32 = arith.constant 0 : i32
    %c0_i32_0 = arith.constant 0 : i32
    return %arg0, %c0_i32 : i32, i32
  }
  func.func @transform_1(%arg0: i32) -> (i32, i32) {
    %c0_i32 = arith.constant 0 : i32
    %c0_i32_0 = arith.constant 0 : i32
    %c0_i32_1 = arith.constant 0 : i32
    return %c0_i32, %c0_i32_0 : i32, i32
  }
  func.func @transform_2(%arg0: i32) -> (i32, i32) {
    %c0_i32 = arith.constant 0 : i32
    %c0_i32_0 = arith.constant 0 : i32
    %c0_i32_1 = arith.constant 0 : i32
    return %c0_i32, %c0_i32_0 : i32, i32
  }
  func.func @transform_3(%arg0: i32) -> (i32, i32) {
    %c0_i32 = arith.constant 0 : i32
    %c0_i32_0 = arith.constant 0 : i32
    %c0_i32_1 = arith.constant 0 : i32
    return %c0_i32, %c0_i32_0 : i32, i32
  }
  func.func @transform_4(%arg0: i32) -> (i32, i32) {
    %c0_i32 = arith.constant 0 : i32
    %c0_i32_0 = arith.constant 0 : i32
    %c0_i32_1 = arith.constant 0 : i32
    return %c0_i32, %c0_i32_0 : i32, i32
  }
  func.func @transform_5(%arg0: i32) -> (i32, i32) {
    %c0_i32 = arith.constant 0 : i32
    %c0_i32_0 = arith.constant 0 : i32
    return %arg0, %c0_i32 : i32, i32
  }
}

</mosaic_0001>

<llo_original>
// kernel: detector_forward.1
$region0: #{detector_forward.1}
  #allocation0 [shape = 'u32[]', space=smem, size = 0x4, offset = 0x4, fixed_abs, tag = 'smem constant byte address 0x4 - core index']
  #allocation1 [shape = 'u32[144,128]{1,0:T(1,128)}', space=vmem, size = 0x12000, scoped, tag = 'internal scratch']
  %s0 = inlined_call_operand.vmem [shape: f32[8,32], index: 0, kind: input, shape index: {}]
  %s1 = inlined_call_operand.vmem [shape: f32[32,128], index: 1, kind: input, shape index: {}]
  %s2 = inlined_call_operand.vmem [shape: f32[1,128], index: 2, kind: input, shape index: {}]
  %s3 = inlined_call_operand.vmem [shape: f32[128,8], index: 3, kind: input, shape index: {}]
  %s4 = inlined_call_operand.vmem [shape: f32[1,8], index: 4, kind: input, shape index: {}]
  %s5 = inlined_call_operand.vmem [shape: f32[8,8], index: 5, kind: output, shape index: {}]
  %s6 = sld [smem:[#allocation0]]
  $region30: #{detector_forward.1} parent=0
    _
  %s8 = ssub.s32 1, %s6
  %s9 = scalar_select 0, %s8, %s6
  // Predicated region
  $region2: #{detector_forward.1} parent=0 // pred_check
    _
  $region3: #{detector_forward.1} parent=0 // pred_check_branch
    %11 = sbr.rel (0) target = $region5
  $region4: #{detector_forward.1} parent=0 // pred_region
    _
  $region5: #{detector_forward.1} parent=0 // pred_fallthru
    _
  // Predicated region
  $region6: #{detector_forward.1} parent=0 // pred_check
    _
  $region7: #{detector_forward.1} parent=0 // pred_check_branch
    %13 = sbr.rel (0) target = $region9
  $region8: #{detector_forward.1} parent=0 // pred_region
    _
  $region9: #{detector_forward.1} parent=0 // pred_fallthru
    _
  // Predicated region
  $region10: #{detector_forward.1} parent=0 // pred_check
    _
  $region11: #{detector_forward.1} parent=0 // pred_check_branch
    %15 = sbr.rel (0) target = $region13
  $region12: #{detector_forward.1} parent=0 // pred_region
    _
  $region13: #{detector_forward.1} parent=0 // pred_fallthru
    _
  // Predicated region
  $region14: #{detector_forward.1} parent=0 // pred_check
    _
  $region15: #{detector_forward.1} parent=0 // pred_check_branch
    %17 = sbr.rel (0) target = $region17
  $region16: #{detector_forward.1} parent=0 // pred_region
    _
  $region17: #{detector_forward.1} parent=0 // pred_fallthru
    _
  // Predicated region
  $region18: #{detector_forward.1} parent=0 // pred_check
    _
  $region19: #{detector_forward.1} parent=0 // pred_check_branch
    %19 = sbr.rel (0) target = $region21
  $region20: #{detector_forward.1} parent=0 // pred_region
    _
  $region21: #{detector_forward.1} parent=0 // pred_fallthru
    _
  %v20 = vld [vmem:[%s0] sm:$0xff]
  %v21 = vld [vmem:[%s1] sm:$0xff]
  %v22 = vld [vmem:[%s1 + $0x8] sm:$0xff]
  %v23 = vld [vmem:[%s1 + $0x10] sm:$0xff]
  %v24 = vld [vmem:[%s1 + $0x18] sm:$0xff]
  %v25 = vld [vmem:[%s2] sm:$0x1]
  %v27 = vlaneseq
  %v28 = vshrl.u32 %v27, 7
  %v29 = vsub.s32 0, %v28
  %v30 = vrot.slane %v25, %v29
  %vm32 = vcmask 261120
  %v34 = vsel %vm32, %v20, 0
  %36 = vmatprep.subr.mxu0 0.0
  %37 = vmatpush1.msra.mxu0 %v21
  %38 = vmatprep.subr.mxu0 0.0
  %39 = vmatpush1.msra.mxu0 %v22
  %40 = vmatprep.subr.mxu0 0.0
  %41 = vmatpush1.msra.mxu0 %v23
  %42 = vmatprep.subr.mxu0 0.0
  %43 = vmatpush1.msra.mxu0 %v24
  %44 = vmatprep.subr.mxu0 0.0
  %45 = vmatpush1.msra.mxu0 0.0
  %46 = vmatprep.subr.mxu0 0.0
  %47 = vmatpush1.msra.mxu0 0.0
  %48 = vmatprep.subr.mxu0 0.0
  %49 = vmatpush1.msra.mxu0 0.0
  %50 = vmatprep.subr.mxu0 0.0
  %51 = vmatpush1.msra.mxu0 0.0
  %52 = vmatprep.subr.mxu0 0.0
  %53 = vmatpush1.msra.mxu0 0.0
  %54 = vmatprep.subr.mxu0 0.0
  %55 = vmatpush1.msra.mxu0 0.0
  %56 = vmatprep.subr.mxu0 0.0
  %57 = vmatpush1.msra.mxu0 0.0
  %58 = vmatprep.subr.mxu0 0.0
  %59 = vmatpush1.msra.mxu0 0.0
  %60 = vmatprep.subr.mxu0 0.0
  %61 = vmatpush1.msra.mxu0 0.0
  %62 = vmatprep.subr.mxu0 0.0
  %63 = vmatpush1.msra.mxu0 0.0
  %64 = vmatprep.subr.mxu0 0.0
  %65 = vmatpush1.msra.mxu0 0.0
  %66 = vmatprep.subr.mxu0 0.0
  %67 = vmatpush1.msra.mxu0 0.0
  %68 = vmatprep.subr.mxu0 0.0
  %69 = vmatpush1.msra.mxu0 0.0
  %70 = vmatprep.subr.mxu0 0.0
  %71 = vmatpush1.msra.mxu0 0.0
  %72 = vmatprep.subr.mxu0 0.0
  %73 = vmatpush1.msra.mxu0 0.0
  %74 = vmatprep.subr.mxu0 0.0
  %75 = vmatpush1.msra.mxu0 0.0
  %76 = vmatprep.subr.mxu0 0.0
  %77 = vmatpush1.msra.mxu0 0.0
  %78 = vmatprep.subr.mxu0 0.0
  %79 = vmatpush1.msra.mxu0 0.0
  %80 = vmatprep.subr.mxu0 0.0
  %81 = vmatpush1.msra.mxu0 0.0
  %82 = vmatprep.subr.mxu0 0.0
  %83 = vmatpush1.msra.mxu0 0.0
  %84 = vmatprep.subr.mxu0 0.0
  %85 = vmatpush1.msra.mxu0 0.0
  %86 = vmatprep.subr.mxu0 0.0
  %87 = vmatpush1.msra.mxu0 0.0
  %88 = vmatprep.subr.mxu0 0.0
  %89 = vmatpush1.msra.mxu0 0.0
  %90 = vmatprep.subr.mxu0 0.0
  %91 = vmatpush1.msra.mxu0 0.0
  %92 = vmatprep.subr.mxu0 0.0
  %93 = vmatpush1.msra.mxu0 0.0
  %94 = vmatprep.subr.mxu0 0.0
  %95 = vmatpush1.msra.mxu0 0.0
  %96 = vmatprep.subr.mxu0 0.0
  %97 = vmatpush1.msra.mxu0 0.0
  %98 = vmatprep.subr.mxu0 0.0
  %99 = vmatpush1.msra.mxu0 0.0
  %100 = vmatprep.mubr.f32.mxu0 0.0
  %101 = vmatmul.mubr.f32.gmra.mrb[0].mxu0 %v34
  %v102 = vpop.f32.mrb[0].mxu0
  %v103 = vadd.f32 %v30, %v102
  %v104 = vpop.f32.mrb[0].mxu0
  %105 = vdwg.mxu0
  %v106 = vmax.f32 %v103, 0.0
  %v107 = vld [vmem:[%s3] sm:$0xff]
  %v108 = vld [vmem:[%s3 + $0x8] sm:$0xff]
  %v109 = vld [vmem:[%s3 + $0x10] sm:$0xff]
  %v110 = vld [vmem:[%s3 + $0x18] sm:$0xff]
  %v111 = vld [vmem:[%s3 + $0x20] sm:$0xff]
  %v112 = vld [vmem:[%s3 + $0x28] sm:$0xff]
  %v113 = vld [vmem:[%s3 + $0x30] sm:$0xff]
  %v114 = vld [vmem:[%s3 + $0x38] sm:$0xff]
  %v115 = vld [vmem:[%s3 + $0x40] sm:$0xff]
  %v116 = vld [vmem:[%s3 + $0x48] sm:$0xff]
  %v117 = vld [vmem:[%s3 + $0x50] sm:$0xff]
  %v118 = vld [vmem:[%s3 + $0x58] sm:$0xff]
  %v119 = vld [vmem:[%s3 + $0x60] sm:$0xff]
  %v120 = vld [vmem:[%s3 + $0x68] sm:$0xff]
  %v121 = vld [vmem:[%s3 + $0x70] sm:$0xff]
  %v122 = vld [vmem:[%s3 + $0x78] sm:$0xff]
  %v123 = vld [vmem:[%s4] sm:$0x1]
  %v125 = vlaneseq
  %v126 = vshrl.u32 %v125, 7
  %v127 = vsub.s32 0, %v126
  %v128 = vrot.slane %v123, %v127
  %130 = vmatprep.subr.mxu0 0.0
  %131 = vmatpush1.msra.mxu0 %v107
  %132 = vmatprep.subr.mxu0 0.0
  %133 = vmatpush1.msra.mxu0 %v108
  %134 = vmatprep.subr.mxu0 0.0
  %135 = vmatpush1.msra.mxu0 %v109
  %136 = vmatprep.subr.mxu0 0.0
  %137 = vmatpush1.msra.mxu0 %v110
  %138 = vmatprep.subr.mxu0 0.0
  %139 = vmatpush1.msra.mxu0 %v111
  %140 = vmatprep.subr.mxu0 0.0
  %141 = vmatpush1.msra.mxu0 %v112
  %142 = vmatprep.subr.mxu0 0.0
  %143 = vmatpush1.msra.mxu0 %v113
  %144 = vmatprep.subr.mxu0 0.0
  %145 = vmatpush1.msra.mxu0 %v114
  %146 = vmatprep.subr.mxu0 0.0
  %147 = vmatpush1.msra.mxu0 %v115
  %148 = vmatprep.subr.mxu0 0.0
  %149 = vmatpush1.msra.mxu0 %v116
  %150 = vmatprep.subr.mxu0 0.0
  %151 = vmatpush1.msra.mxu0 %v117
  %152 = vmatprep.subr.mxu0 0.0
  %153 = vmatpush1.msra.mxu0 %v118
  %154 = vmatprep.subr.mxu0 0.0
  %155 = vmatpush1.msra.mxu0 %v119
  %156 = vmatprep.subr.mxu0 0.0
  %157 = vmatpush1.msra.mxu0 %v120
  %158 = vmatprep.subr.mxu0 0.0
  %159 = vmatpush1.msra.mxu0 %v121
  %160 = vmatprep.subr.mxu0 0.0
  %161 = vmatpush1.msra.mxu0 %v122
  %162 = vmatprep.subr.mxu0 0.0
  %163 = vmatpush1.msra.mxu0 0.0
  %164 = vmatprep.subr.mxu0 0.0
  %165 = vmatpush1.msra.mxu0 0.0
  %166 = vmatprep.subr.mxu0 0.0
  %167 = vmatpush1.msra.mxu0 0.0
  %168 = vmatprep.subr.mxu0 0.0
  %169 = vmatpush1.msra.mxu0 0.0
  %170 = vmatprep.subr.mxu0 0.0
  %171 = vmatpush1.msra.mxu0 0.0
  %172 = vmatprep.subr.mxu0 0.0
  %173 = vmatpush1.msra.mxu0 0.0
  %174 = vmatprep.subr.mxu0 0.0
  %175 = vmatpush1.msra.mxu0 0.0
  %176 = vmatprep.subr.mxu0 0.0
  %177 = vmatpush1.msra.mxu0 0.0
  %178 = vmatprep.subr.mxu0 0.0
  %179 = vmatpush1.msra.mxu0 0.0
  %180 = vmatprep.subr.mxu0 0.0
  %181 = vmatpush1.msra.mxu0 0.0
  %182 = vmatprep.subr.mxu0 0.0
  %183 = vmatpush1.msra.mxu0 0.0
  %184 = vmatprep.subr.mxu0 0.0
  %185 = vmatpush1.msra.mxu0 0.0
  %186 = vmatprep.subr.mxu0 0.0
  %187 = vmatpush1.msra.mxu0 0.0
  %188 = vmatprep.subr.mxu0 0.0
  %189 = vmatpush1.msra.mxu0 0.0
  %190 = vmatprep.subr.mxu0 0.0
  %191 = vmatpush1.msra.mxu0 0.0
  %192 = vmatprep.subr.mxu0 0.0
  %193 = vmatpush1.msra.mxu0 0.0
  %194 = vmatprep.mubr.f32.mxu0 0.0
  %195 = vmatmul.mubr.f32.gmra.mrb[0].mxu0 %v106
  %v196 = vpop.f32.mrb[0].mxu0
  %v197 = vadd.f32 %v128, %v196
  %v198 = vpop.f32.mrb[0].mxu0
  %199 = vdwg.mxu0
  %vm200 = vcmask 64512
  %201 = vst.msk [vmem:[%s5] sm:$0xff] %vm200, %v197
  // Predicated region
  $region22: #{detector_forward.1} parent=0 // pred_check
    _
  $region23: #{detector_forward.1} parent=0 // pred_check_branch
    %203 = sbr.rel (0) target = $region25
  $region24: #{detector_forward.1} parent=0 // pred_region
    _
  $region25: #{detector_forward.1} parent=0 // pred_fallthru
    _
  // Predicated region
  $region26: #{detector_forward.1} parent=0 // pred_check
    _
  $region27: #{detector_forward.1} parent=0 // pred_check_branch
    %205 = sbr.rel (0) target = $region29
  $region28: #{detector_forward.1} parent=0 // pred_region
    _
  $region29: #{detector_forward.1} parent=0 // pred_fallthru
    _

</llo_original>
